<compile_context>
chip_gen: v7x
topology: tpu7x:2x2x1
jax: 0.10.0
libtpu: 0.0.40
codegen_flags: <defaults>
</compile_context>

<pallas_src>
import functools

import jax
import jax.numpy as jnp
from jax.experimental import pallas as pl
from jax.experimental.pallas import tpu as pltpu

_LANE = 128
_HIDDEN_PAD = 128  # keep exactly 128 (native MXU width on v5e; <=1 pass everywhere)


def _round_up(n, m):
    return ((n + m - 1) // m) * m


def _decoder_kernel(x_ref,
                    w1_ref, b1_ref,
                    w2_ref, b2_ref,
                    w3_ref, b3_ref,
                    w4_ref, b4_ref,
                    o_ref):
    # 4 chained lane-dense MXU matmuls (bf16 operands, f32 accumulation) + VPU
    # bias/ReLU in f32 (v5e VPU has no bf16).  Weights/biases are resident in
    # VMEM across all grid steps (constant-index full-block specs).
    x = x_ref[...].astype(jnp.bfloat16)          # cast folded into the kernel
    h = jnp.dot(x, w1_ref[...],
                preferred_element_type=jnp.float32) + b1_ref[...]
    h = jnp.maximum(h, 0.0)
    h = jnp.dot(h.astype(jnp.bfloat16), w2_ref[...],
                preferred_element_type=jnp.float32) + b2_ref[...]
    h = jnp.maximum(h, 0.0)
    h = jnp.dot(h.astype(jnp.bfloat16), w3_ref[...],
                preferred_element_type=jnp.float32) + b3_ref[...]
    h = jnp.maximum(h, 0.0)
    out = jnp.dot(h.astype(jnp.bfloat16), w4_ref[...],
                  preferred_element_type=jnp.float32) + b4_ref[...]
    o_ref[...] = out.astype(o_ref.dtype)


def prepare_decoder_params(params):
    """One-time weight prep (call once, outside the hot path).

    Zero-pads the 32/64 hidden widths to 128 lanes, pads the output width to a
    multiple of 128, casts weights to bf16 (MXU operands) and biases to f32
    (added to the f32 accumulator).  Padding is exact-zero so results are
    bit-identical to the un-padded bf16/f32 computation.
    Returns (prepared_arrays, out_dim).
    """
    (w1, b1), (w2, b2), (w3, b3), (w4, b4) = params
    out_dim = w4.shape[1]
    out_pad = _round_up(out_dim, _LANE)
    H = _HIDDEN_PAD

    def pad2(a, rows, cols):
        return jnp.pad(a, ((0, rows - a.shape[0]), (0, cols - a.shape[1])))

    w1p = pad2(w1, w1.shape[0], H).astype(jnp.bfloat16)
    b1p = pad2(b1, 1, H).astype(jnp.float32)
    w2p = pad2(w2, H, H).astype(jnp.bfloat16)
    b2p = pad2(b2, 1, H).astype(jnp.float32)
    w3p = pad2(w3, H, H).astype(jnp.bfloat16)
    b3p = pad2(b3, 1, H).astype(jnp.float32)
    w4p = pad2(w4, H, out_pad).astype(jnp.bfloat16)   # zero cols -> zero output pad
    b4p = pad2(b4, 1, out_pad).astype(jnp.float32)
    return (w1p, b1p, w2p, b2p, w3p, b3p, w4p, b4p), out_dim


@functools.partial(jax.jit,
                   static_argnames=("out_dim", "batch_tile", "return_padded"))
def decoder_forward(x, prepared, out_dim, batch_tile=2048, return_padded=False):
    """x: [B, latent_dim] float32 -> [B, out_dim] float32 (or padded slab)."""
    w1, b1, w2, b2, w3, b3, w4, b4 = prepared
    B, latent_dim = x.shape
    out_pad = w4.shape[1]

    # Batch tiling:
    #  * B <= batch_tile: one grid step (no pointless per-step overhead on the
    #    single-TC v5e/v6e; weights + one tile are KiB-scale, VMEM never binds).
    #  * B  > batch_tile: >=4 tiles -> BlockSpec double-buffering hides the
    #    x/out DMAs and the "parallel" grid axis shards across v7x's 2 TCs.
    #    Tiles are multiples of 16 (bf16 sublane tile) to avoid relayouts.
    if B <= batch_tile:
        tb = B                     # block == full array dims -> always legal
    else:
        tb = min(batch_tile, _round_up(pl.cdiv(B, 4), 16))
    grid = (pl.cdiv(B, tb),)

    def full_spec(arr):
        # Constant-index full block: resident in VMEM across all grid steps.
        return pl.BlockSpec(arr.shape, lambda i: (0, 0))

    H = _HIDDEN_PAD
    cost = pl.CostEstimate(
        flops=2 * B * (latent_dim * H + H * H + H * H + H * out_pad),
        transcendentals=0,
        bytes_accessed=(B * latent_dim * 4 + B * out_pad * 4
                        + sum(int(a.size) * a.dtype.itemsize
                              for a in (w1, b1, w2, b2, w3, b3, w4, b4))),
    )

    out_padded = pl.pallas_call(
        _decoder_kernel,
        out_shape=jax.ShapeDtypeStruct((B, out_pad), jnp.float32),
        grid_spec=pltpu.PrefetchScalarGridSpec(
            num_scalar_prefetch=0,
            grid=grid,
            in_specs=[
                pl.BlockSpec((tb, latent_dim), lambda i: (i, 0)),
                full_spec(w1), full_spec(b1),
                full_spec(w2), full_spec(b2),
                full_spec(w3), full_spec(b3),
                full_spec(w4), full_spec(b4),
            ],
            out_specs=pl.BlockSpec((tb, out_pad), lambda i: (i, 0)),
        ),
        compiler_params=pltpu.CompilerParams(
            dimension_semantics=("parallel",)),
        cost_estimate=cost,
    )(x, w1, b1, w2, b2, w3, b3, w4, b4)

    if return_padded or out_pad == out_dim:
        return out_padded
    # TODO(synk): if the downstream consumer can take the [B, out_pad] slab,
    # pass return_padded=True and drop this extra HBM pass.
    return out_padded[:, :out_dim]


def init_decoder_params(key, latent_dim, output_shape):
    """Deterministic init mimicking nn.Linear's U(-1/sqrt(fan_in), 1/sqrt(fan_in)).

    Weights stored as [in_features, out_features] (transposed from PyTorch),
    biases as [1, out_features] for a 2-D TPU-friendly layout.
    """
    dims = [latent_dim, 32, 64, 128, output_shape]
    params = []
    for fan_in, fan_out in zip(dims[:-1], dims[1:]):
        key, kw, kb = jax.random.split(key, 3)
        bound = 1.0 / jnp.sqrt(jnp.float32(fan_in))
        w = jax.random.uniform(kw, (fan_in, fan_out), jnp.float32, -bound, bound)
        b = jax.random.uniform(kb, (1, fan_out), jnp.float32, -bound, bound)
        params.append((w, b))
    return tuple(params)


def decoder_reference(x, params):
    """Pure-JAX reference emulating the kernel's bf16-operand / f32-acc numerics."""
    (w1, b1), (w2, b2), (w3, b3), (w4, b4) = params

    def lin(h, w, b):
        return jnp.dot(h.astype(jnp.bfloat16), w.astype(jnp.bfloat16),
                       preferred_element_type=jnp.float32) + b

    h = jnp.maximum(lin(x, w1, b1), 0.0)
    h = jnp.maximum(lin(h, w2, b2), 0.0)
    h = jnp.maximum(lin(h, w3, b3), 0.0)
    return lin(h, w4, b4)


if __name__ == "__main__":
    latent_dim = 16
    output_shape = 64

    key = jax.random.PRNGKey(0)
    key, kx = jax.random.split(key)
    params = init_decoder_params(key, latent_dim, output_shape)
    prepared, out_dim = prepare_decoder_params(params)

    # Case 1: small batch -> single grid step (the common inference path).
    batch = 32
    x = jax.random.normal(kx, (batch, latent_dim), jnp.float32)
    out = jax.block_until_ready(decoder_forward(x, prepared, out_dim))
    ref = decoder_reference(x, params)
    assert out.shape == (batch, output_shape)
    assert jnp.allclose(out, ref, atol=2e-2, rtol=2e-2), "mismatch (single tile)"

    # Case 2: multi-step grid with a partial last tile (masked output writeback).
    batch2 = 40
    key, kx2 = jax.random.split(key)
    x2 = jax.random.normal(kx2, (batch2, latent_dim), jnp.float32)
    out2 = jax.block_until_ready(
        decoder_forward(x2, prepared, out_dim, batch_tile=16))
    ref2 = decoder_reference(x2, params)
    assert out2.shape == (batch2, output_shape)
    assert jnp.allclose(out2, ref2, atol=2e-2, rtol=2e-2), "mismatch (tiled path)"

    print("KERNEL_OK")
</pallas_src>

<mosaic_0001>
module attributes {stable_mosaic.version = 11 : i64} {
  func.func @_decoder_kernel(%arg0: i32, %arg1: memref<32x16xf32, #tpu.memory_space<vmem>>, %arg2: memref<16x128xbf16, #tpu.memory_space<vmem>>, %arg3: memref<1x128xf32, #tpu.memory_space<vmem>>, %arg4: memref<128x128xbf16, #tpu.memory_space<vmem>>, %arg5: memref<1x128xf32, #tpu.memory_space<vmem>>, %arg6: memref<128x128xbf16, #tpu.memory_space<vmem>>, %arg7: memref<1x128xf32, #tpu.memory_space<vmem>>, %arg8: memref<128x128xbf16, #tpu.memory_space<vmem>>, %arg9: memref<1x128xf32, #tpu.memory_space<vmem>>, %arg10: memref<32x128xf32, #tpu.memory_space<vmem>>) attributes {dimension_semantics = [#tpu.dimension_semantics<parallel>], iteration_bounds = array<i64: 1>, scalar_prefetch = 0 : i64, scratch_operands = 0 : i64, tpu.core_type = #tpu.core_type<tc>, window_params = [{transform_indices = @transform_0, window_bounds = array<i64: 32, 16>}, {pipeline_mode = #tpu.pipeline_mode<synchronous>, transform_indices = @transform_1, window_bounds = array<i64: 16, 128>}, {pipeline_mode = #tpu.pipeline_mode<synchronous>, transform_indices = @transform_2, window_bounds = array<i64: 1, 128>}, {pipeline_mode = #tpu.pipeline_mode<synchronous>, transform_indices = @transform_3, window_bounds = array<i64: 128, 128>}, {pipeline_mode = #tpu.pipeline_mode<synchronous>, transform_indices = @transform_4, window_bounds = array<i64: 1, 128>}, {pipeline_mode = #tpu.pipeline_mode<synchronous>, transform_indices = @transform_5, window_bounds = array<i64: 128, 128>}, {pipeline_mode = #tpu.pipeline_mode<synchronous>, transform_indices = @transform_6, window_bounds = array<i64: 1, 128>}, {pipeline_mode = #tpu.pipeline_mode<synchronous>, transform_indices = @transform_7, window_bounds = array<i64: 128, 128>}, {pipeline_mode = #tpu.pipeline_mode<synchronous>, transform_indices = @transform_8, window_bounds = array<i64: 1, 128>}, {transform_indices = @transform_9, window_bounds = array<i64: 32, 128>}]} {
    %c0 = arith.constant 0 : index
    %c0_0 = arith.constant 0 : index
    %0 = vector.load %arg1[%c0, %c0_0] : memref<32x16xf32, #tpu.memory_space<vmem>>, vector<32x16xf32>
    %1 = arith.truncf %0 : vector<32x16xf32> to vector<32x16xbf16>
    %c0_1 = arith.constant 0 : index
    %c0_2 = arith.constant 0 : index
    %2 = vector.load %arg2[%c0_1, %c0_2] : memref<16x128xbf16, #tpu.memory_space<vmem>>, vector<16x128xbf16>
    %cst = arith.constant dense<0.000000e+00> : vector<32x128xf32>
    %3 = tpu.matmul %1, %2, %cst {dimension_numbers = #tpu.dot_dimension_numbers<[1], [0], [0], [1], [0, 0, 1, 1], [], []>} : vector<32x16xbf16>, vector<16x128xbf16>, vector<32x128xf32> -> vector<32x128xf32>
    %c0_3 = arith.constant 0 : index
    %c0_4 = arith.constant 0 : index
    %4 = vector.load %arg3[%c0_3, %c0_4] : memref<1x128xf32, #tpu.memory_space<vmem>>, vector<1x128xf32>
    %5 = vector.broadcast %4 : vector<1x128xf32> to vector<32x128xf32>
    %6 = arith.addf %3, %5 : vector<32x128xf32>
    %cst_5 = arith.constant 0.000000e+00 : f32
    %7 = vector.broadcast %cst_5 : f32 to vector<32x128xf32>
    %8 = arith.maximumf %6, %7 : vector<32x128xf32>
    %9 = arith.truncf %8 : vector<32x128xf32> to vector<32x128xbf16>
    %c0_6 = arith.constant 0 : index
    %c0_7 = arith.constant 0 : index
    %10 = vector.load %arg4[%c0_6, %c0_7] : memref<128x128xbf16, #tpu.memory_space<vmem>>, vector<128x128xbf16>
    %cst_8 = arith.constant dense<0.000000e+00> : vector<32x128xf32>
    %11 = tpu.matmul %9, %10, %cst_8 {dimension_numbers = #tpu.dot_dimension_numbers<[1], [0], [0], [1], [0, 0, 1, 1], [], []>} : vector<32x128xbf16>, vector<128x128xbf16>, vector<32x128xf32> -> vector<32x128xf32>
    %c0_9 = arith.constant 0 : index
    %c0_10 = arith.constant 0 : index
    %12 = vector.load %arg5[%c0_9, %c0_10] : memref<1x128xf32, #tpu.memory_space<vmem>>, vector<1x128xf32>
    %13 = vector.broadcast %12 : vector<1x128xf32> to vector<32x128xf32>
    %14 = arith.addf %11, %13 : vector<32x128xf32>
    %cst_11 = arith.constant 0.000000e+00 : f32
    %15 = vector.broadcast %cst_11 : f32 to vector<32x128xf32>
    %16 = arith.maximumf %14, %15 : vector<32x128xf32>
    %17 = arith.truncf %16 : vector<32x128xf32> to vector<32x128xbf16>
    %c0_12 = arith.constant 0 : index
    %c0_13 = arith.constant 0 : index
    %18 = vector.load %arg6[%c0_12, %c0_13] : memref<128x128xbf16, #tpu.memory_space<vmem>>, vector<128x128xbf16>
    %cst_14 = arith.constant dense<0.000000e+00> : vector<32x128xf32>
    %19 = tpu.matmul %17, %18, %cst_14 {dimension_numbers = #tpu.dot_dimension_numbers<[1], [0], [0], [1], [0, 0, 1, 1], [], []>} : vector<32x128xbf16>, vector<128x128xbf16>, vector<32x128xf32> -> vector<32x128xf32>
    %c0_15 = arith.constant 0 : index
    %c0_16 = arith.constant 0 : index
    %20 = vector.load %arg7[%c0_15, %c0_16] : memref<1x128xf32, #tpu.memory_space<vmem>>, vector<1x128xf32>
    %21 = vector.broadcast %20 : vector<1x128xf32> to vector<32x128xf32>
    %22 = arith.addf %19, %21 : vector<32x128xf32>
    %cst_17 = arith.constant 0.000000e+00 : f32
    %23 = vector.broadcast %cst_17 : f32 to vector<32x128xf32>
    %24 = arith.maximumf %22, %23 : vector<32x128xf32>
    %25 = arith.truncf %24 : vector<32x128xf32> to vector<32x128xbf16>
    %c0_18 = arith.constant 0 : index
    %c0_19 = arith.constant 0 : index
    %26 = vector.load %arg8[%c0_18, %c0_19] : memref<128x128xbf16, #tpu.memory_space<vmem>>, vector<128x128xbf16>
    %cst_20 = arith.constant dense<0.000000e+00> : vector<32x128xf32>
    %27 = tpu.matmul %25, %26, %cst_20 {dimension_numbers = #tpu.dot_dimension_numbers<[1], [0], [0], [1], [0, 0, 1, 1], [], []>} : vector<32x128xbf16>, vector<128x128xbf16>, vector<32x128xf32> -> vector<32x128xf32>
    %c0_21 = arith.constant 0 : index
    %c0_22 = arith.constant 0 : index
    %28 = vector.load %arg9[%c0_21, %c0_22] : memref<1x128xf32, #tpu.memory_space<vmem>>, vector<1x128xf32>
    %29 = vector.broadcast %28 : vector<1x128xf32> to vector<32x128xf32>
    %30 = arith.addf %27, %29 : vector<32x128xf32>
    %c0_23 = arith.constant 0 : index
    %c0_24 = arith.constant 0 : index
    %31 = vector.load %arg10[%c0_23, %c0_24] : memref<32x128xf32, #tpu.memory_space<vmem>>, vector<32x128xf32>
    tpu.vector_store %arg10[%c0_23, %c0_24], %30 {strides = array<i32>} : memref<32x128xf32, #tpu.memory_space<vmem>>, vector<32x128xf32>,
    return
  }
  func.func @transform_0(%arg0: i32) -> (i32, i32) {
    %c0_i32 = arith.constant 0 : i32
    %c0_i32_0 = arith.constant 0 : i32
    return %arg0, %c0_i32 : i32, i32
  }
  func.func @transform_1(%arg0: i32) -> (i32, i32) {
    %c0_i32 = arith.constant 0 : i32
    %c0_i32_0 = arith.constant 0 : i32
    %c0_i32_1 = arith.constant 0 : i32
    return %c0_i32, %c0_i32_0 : i32, i32
  }
  func.func @transform_2(%arg0: i32) -> (i32, i32) {
    %c0_i32 = arith.constant 0 : i32
    %c0_i32_0 = arith.constant 0 : i32
    %c0_i32_1 = arith.constant 0 : i32
    return %c0_i32, %c0_i32_0 : i32, i32
  }
  func.func @transform_3(%arg0: i32) -> (i32, i32) {
    %c0_i32 = arith.constant 0 : i32
    %c0_i32_0 = arith.constant 0 : i32
    %c0_i32_1 = arith.constant 0 : i32
    return %c0_i32, %c0_i32_0 : i32, i32
  }
  func.func @transform_4(%arg0: i32) -> (i32, i32) {
    %c0_i32 = arith.constant 0 : i32
    %c0_i32_0 = arith.constant 0 : i32
    %c0_i32_1 = arith.constant 0 : i32
    return %c0_i32, %c0_i32_0 : i32, i32
  }
  func.func @transform_5(%arg0: i32) -> (i32, i32) {
    %c0_i32 = arith.constant 0 : i32
    %c0_i32_0 = arith.constant 0 : i32
    %c0_i32_1 = arith.constant 0 : i32
    return %c0_i32, %c0_i32_0 : i32, i32
  }
  func.func @transform_6(%arg0: i32) -> (i32, i32) {
    %c0_i32 = arith.constant 0 : i32
    %c0_i32_0 = arith.constant 0 : i32
    %c0_i32_1 = arith.constant 0 : i32
    return %c0_i32, %c0_i32_0 : i32, i32
  }
  func.func @transform_7(%arg0: i32) -> (i32, i32) {
    %c0_i32 = arith.constant 0 : i32
    %c0_i32_0 = arith.constant 0 : i32
    %c0_i32_1 = arith.constant 0 : i32
    return %c0_i32, %c0_i32_0 : i32, i32
  }
  func.func @transform_8(%arg0: i32) -> (i32, i32) {
    %c0_i32 = arith.constant 0 : i32
    %c0_i32_0 = arith.constant 0 : i32
    %c0_i32_1 = arith.constant 0 : i32
    return %c0_i32, %c0_i32_0 : i32, i32
  }
  func.func @transform_9(%arg0: i32) -> (i32, i32) {
    %c0_i32 = arith.constant 0 : i32
    %c0_i32_0 = arith.constant 0 : i32
    return %arg0, %c0_i32 : i32, i32
  }
}

</mosaic_0001>

<llo_original>
// kernel: decoder_forward.1
$region0: #{decoder_forward.1}
  #allocation0 [shape = 'u32[]', space=smem, size = 0x4, offset = 0x4, fixed_abs, tag = 'smem constant byte address 0x4 - core index']
  #allocation1 [shape = 'u32[144,128]{1,0:T(1,128)}', space=vmem, size = 0x12000, scoped, tag = 'internal scratch']
  %s0 = inlined_call_operand.vmem [shape: f32[32,16], index: 0, kind: input, shape index: {}]
  %s1 = inlined_call_operand.hbm [shape: bf16[16,128], index: 1, kind: input, shape index: {}]
  %s2 = inlined_call_operand.vmem [shape: f32[1,128], index: 2, kind: input, shape index: {}]
  %s3 = inlined_call_operand.hbm [shape: bf16[128,128], index: 3, kind: input, shape index: {}]
  %s4 = inlined_call_operand.vmem [shape: f32[1,128], index: 4, kind: input, shape index: {}]
  %s5 = inlined_call_operand.vmem [shape: bf16[128,128], index: 5, kind: input, shape index: {}]
  %s6 = inlined_call_operand.vmem [shape: f32[1,128], index: 6, kind: input, shape index: {}]
  %s7 = inlined_call_operand.hbm [shape: bf16[128,128], index: 7, kind: input, shape index: {}]
  %s8 = inlined_call_operand.vmem [shape: f32[1,128], index: 8, kind: input, shape index: {}]
  %s9 = inlined_call_operand.hbm [shape: f32[32,128], index: 9, kind: output, shape index: {}]
  %s10 = sld [smem:[#allocation0]]
  $region58: #{decoder_forward.1} parent=0
    _
  %s12 = ssub.s32 1, %s10
  %s13 = scalar_select 0, %s12, %s10
  $region1: #{decoder_forward.1} parent=0
    #allocation2 [shape = 'u8[4096]{0}', space=vmem, size = 0x1000, scoped, tag = 'input window, operand 1, single buffered']
    #allocation3 [shape = 's32[1]{0}', space=sflag, size = 0x4, scoped, tag = 'scoped memory for decoder_forward.1']
    #allocation4 [shape = 's32[1]{0}', space=sflag, size = 0x4, scoped, tag = 'scoped memory for decoder_forward.1']
    #allocation5 [shape = 'u8[32768]{0}', space=vmem, size = 0x8000, scoped, tag = 'input window, operand 3, single buffered']
    #allocation6 [shape = 's32[1]{0}', space=sflag, size = 0x4, scoped, tag = 'scoped memory for decoder_forward.1']
    #allocation7 [shape = 'u8[32768]{0}', space=vmem, size = 0x8000, scoped, tag = 'input window, operand 7, single buffered']
    #allocation8 [shape = 'u8[16384]{0}', space=vmem, size = 0x4000, scoped, tag = 'output window, operand 0, single buffered']
    %14 = vsyncpa [#allocation3], 0
    %15 = vsyncpa [#allocation6], 0
    %16 = vsyncpa [#allocation4], 0
    // Predicated region
    $region2: #{decoder_forward.1} parent=1 // pred_check
      _
    $region3: #{decoder_forward.1} parent=1 // pred_check_branch
      %18 = sbr.rel (0) target = $region5
    $region4: #{decoder_forward.1} parent=1 // pred_region
      _
    $region5: #{decoder_forward.1} parent=1 // pred_fallthru
      _
    // Predicated region
    $region6: #{decoder_forward.1} parent=1 // pred_check
      _
    $region7: #{decoder_forward.1} parent=1 // pred_check_branch
      %20 = sbr.rel (0) target = $region9
    $region8: #{decoder_forward.1} parent=1 // pred_region
      %s22 = ssub.s32 128, 128
      %23 = vsyncadd [#allocation3], %s22
      %s24 = sshll.u32 [#allocation2], 4
      %s25 = int_to_ptr.vmem [resolvable:$true] %s24
      %30 = dma.hbm_to_vmem [thread:$0]  %s1, 128, %s25, [#allocation3], 64, 64, 4
    $region9: #{decoder_forward.1} parent=1 // pred_fallthru
      _
    // Predicated region
    $region10: #{decoder_forward.1} parent=1 // pred_check
      _
    $region11: #{decoder_forward.1} parent=1 // pred_check_branch
      %32 = sbr.rel (0) target = $region13
    $region12: #{decoder_forward.1} parent=1 // pred_region
      _
    $region13: #{decoder_forward.1} parent=1 // pred_fallthru
      _
    // Predicated region
    $region14: #{decoder_forward.1} parent=1 // pred_check
      _
    $region15: #{decoder_forward.1} parent=1 // pred_check_branch
      %34 = sbr.rel (0) target = $region17
    $region16: #{decoder_forward.1} parent=1 // pred_region
      %s36 = ssub.s32 1024, 1024
      %37 = vsyncadd [#allocation6], %s36
      %s38 = sshll.u32 [#allocation5], 4
      %s39 = int_to_ptr.vmem [resolvable:$true] %s38
      %44 = dma.hbm_to_vmem [thread:$0]  %s3, 1024, %s39, [#allocation6], 64, 64, 4
    $region17: #{decoder_forward.1} parent=1 // pred_fallthru
      _
    // Predicated region
    $region18: #{decoder_forward.1} parent=1 // pred_check
      _
    $region19: #{decoder_forward.1} parent=1 // pred_check_branch
      %46 = sbr.rel (0) target = $region21
    $region20: #{decoder_forward.1} parent=1 // pred_region
      _
    $region21: #{decoder_forward.1} parent=1 // pred_fallthru
      _
    // Predicated region
    $region22: #{decoder_forward.1} parent=1 // pred_check
      _
    $region23: #{decoder_forward.1} parent=1 // pred_check_branch
      %48 = sbr.rel (0) target = $region25
    $region24: #{decoder_forward.1} parent=1 // pred_region
      _
    $region25: #{decoder_forward.1} parent=1 // pred_fallthru
      _
    // Predicated region
    $region26: #{decoder_forward.1} parent=1 // pred_check
      _
    $region27: #{decoder_forward.1} parent=1 // pred_check_branch
      %50 = sbr.rel (0) target = $region29
    $region28: #{decoder_forward.1} parent=1 // pred_region
      _
    $region29: #{decoder_forward.1} parent=1 // pred_fallthru
      _
    // Predicated region
    $region30: #{decoder_forward.1} parent=1 // pred_check
      _
    $region31: #{decoder_forward.1} parent=1 // pred_check_branch
      %52 = sbr.rel (0) target = $region33
    $region32: #{decoder_forward.1} parent=1 // pred_region
      %s54 = ssub.s32 1024, 1024
      %55 = vsyncadd [#allocation6], %s54
      %s56 = sshll.u32 [#allocation7], 4
      %s57 = int_to_ptr.vmem [resolvable:$true] %s56
      %62 = dma.hbm_to_vmem [thread:$0]  %s7, 1024, %s57, [#allocation6], 64, 64, 4
    $region33: #{decoder_forward.1} parent=1 // pred_fallthru
      _
    // Predicated region
    $region34: #{decoder_forward.1} parent=1 // pred_check
      _
    $region35: #{decoder_forward.1} parent=1 // pred_check_branch
      %64 = sbr.rel (0) target = $region37
    $region36: #{decoder_forward.1} parent=1 // pred_region
      _
    $region37: #{decoder_forward.1} parent=1 // pred_fallthru
      _
    // Predicated region
    $region38: #{decoder_forward.1} parent=1 // pred_check
      _
    $region39: #{decoder_forward.1} parent=1 // pred_check_branch
      %66 = sbr.rel (0) target = $region41
    $region40: #{decoder_forward.1} parent=1 // pred_region
      %67 = dma.done [#allocation3], 128
    $region41: #{decoder_forward.1} parent=1 // pred_fallthru
      _
    // Predicated region
    $region42: #{decoder_forward.1} parent=1 // pred_check
      _
    $region43: #{decoder_forward.1} parent=1 // pred_check_branch
      %69 = sbr.rel (0) target = $region45
    $region44: #{decoder_forward.1} parent=1 // pred_region
      %70 = dma.done [#allocation6], 1024
    $region45: #{decoder_forward.1} parent=1 // pred_fallthru
      _
    // Predicated region
    $region46: #{decoder_forward.1} parent=1 // pred_check
      _
    $region47: #{decoder_forward.1} parent=1 // pred_check_branch
      %72 = sbr.rel (0) target = $region49
    $region48: #{decoder_forward.1} parent=1 // pred_region
      %73 = dma.done [#allocation6], 1024
    $region49: #{decoder_forward.1} parent=1 // pred_fallthru
      _
    %v75 = vld [vmem:[%s0] sm:$0xff]
    %v76 = vld [vmem:[%s0 + $0x8] sm:$0xff]
    %v77 = vld [vmem:[%s0 + $0x10] sm:$0xff]
    %v78 = vld [vmem:[%s0 + $0x18] sm:$0xff]
    %v79 = vpack.c.bf16 %v76, %v75
    %v80 = vpack.c.bf16 %v78, %v77
    %v81 = vld [vmem:[#allocation2] sm:$0xf]
    %v82 = vld [vmem:[#allocation2 + $0x4] sm:$0xf]
    %v83 = vld [vmem:[%s2] sm:$0x1]
    %v85 = vlaneseq
    %v86 = vshrl.u32 %v85, 7
    %v87 = vsub.s32 0, %v86
    %v88 = vrot.slane %v83, %v87
    %v92 = vunpack.c.l.b16 %v81
    %v93 = vunpack.c.l.b16 %v82
    %v94 = vpack.c.b16 %v93, %v92
    %vm96 = vcmask 130048
    %v98 = vsel %vm96, %v79, 0
    %v101 = vsel %vm96, %v80, 0
    %103 = vmatprep.subr.bf16.mxu0 0
    %104 = vmatpush1.bf16.msra.mxu0 %v94
    %105 = vmatprep.subr.bf16.mxu0 0
    %106 = vmatpush1.bf16.msra.mxu0 0
    %107 = vmatprep.subr.bf16.mxu0 0
    %108 = vmatpush1.bf16.msra.mxu0 0
    %109 = vmatprep.subr.bf16.mxu0 0
    %110 = vmatpush1.bf16.msra.mxu0 0
    %111 = vmatprep.subr.bf16.mxu0 0
    %112 = vmatpush1.bf16.msra.mxu0 0
    %113 = vmatprep.subr.bf16.mxu0 0
    %114 = vmatpush1.bf16.msra.mxu0 0
    %115 = vmatprep.subr.bf16.mxu0 0
    %116 = vmatpush1.bf16.msra.mxu0 0
    %117 = vmatprep.subr.bf16.mxu0 0
    %118 = vmatpush1.bf16.msra.mxu0 0
    %119 = vmatprep.subr.bf16.mxu0 0
    %120 = vmatpush1.bf16.msra.mxu0 0
    %121 = vmatprep.subr.bf16.mxu0 0
    %122 = vmatpush1.bf16.msra.mxu0 0
    %123 = vmatprep.subr.bf16.mxu0 0
    %124 = vmatpush1.bf16.msra.mxu0 0
    %125 = vmatprep.subr.bf16.mxu0 0
    %126 = vmatpush1.bf16.msra.mxu0 0
    %127 = vmatprep.subr.bf16.mxu0 0
    %128 = vmatpush1.bf16.msra.mxu0 0
    %129 = vmatprep.subr.bf16.mxu0 0
    %130 = vmatpush1.bf16.msra.mxu0 0
    %131 = vmatprep.subr.bf16.mxu0 0
    %132 = vmatpush1.bf16.msra.mxu0 0
    %133 = vmatprep.subr.bf16.mxu0 0
    %134 = vmatpush1.bf16.msra.mxu0 0
    %135 = vmatprep.mubr.bf16.mxu0 0
    %136 = vmatmul.mubr.bf16.gmra.mrb[0].mxu0 %v98
    %v137 = vpop.f32.mrb[0].mxu0
    %v138 = vadd.f32 %v88, %v137
    %v139 = vpop.f32.mrb[0].mxu0
    %v140 = vpop.f32.mrb[0].mxu0
    %v141 = vadd.f32 %v88, %v140
    %v142 = vpop.f32.mrb[0].mxu0
    %143 = vmatprep.mubr.bf16.mxu0 0
    %144 = vmatmul.mubr.bf16.gmra.mrb[0].mxu0 %v101
    %v145 = vpop.f32.mrb[0].mxu0
    %v146 = vadd.f32 %v88, %v145
    %v147 = vpop.f32.mrb[0].mxu0
    %v148 = vpop.f32.mrb[0].mxu0
    %v149 = vadd.f32 %v88, %v148
    %v150 = vpop.f32.mrb[0].mxu0
    %151 = vdwg.mxu0
    %v152 = vmax.f32 %v138, 0.0
    %v153 = vmax.f32 %v141, 0.0
    %v154 = vmax.f32 %v146, 0.0
    %v155 = vmax.f32 %v149, 0.0
    %v156 = vpack.c.bf16 %v153, %v152
    %v157 = vpack.c.bf16 %v155, %v154
    %v158 = vld [vmem:[#allocation5] sm:$0xf]
    %v159 = vld [vmem:[#allocation5 + $0x4] sm:$0xf]
    %v160 = vld [vmem:[#allocation5 + $0x8] sm:$0xf]
    %v161 = vld [vmem:[#allocation5 + $0xc] sm:$0xf]
    %v162 = vld [vmem:[#allocation5 + $0x10] sm:$0xf]
    %v163 = vld [vmem:[#allocation5 + $0x14] sm:$0xf]
    %v164 = vld [vmem:[#allocation5 + $0x18] sm:$0xf]
    %v165 = vld [vmem:[#allocation5 + $0x1c] sm:$0xf]
    %v166 = vld [vmem:[#allocation5 + $0x20] sm:$0xf]
    %v167 = vld [vmem:[#allocation5 + $0x24] sm:$0xf]
    %v168 = vld [vmem:[#allocation5 + $0x28] sm:$0xf]
    %v169 = vld [vmem:[#allocation5 + $0x2c] sm:$0xf]
    %v170 = vld [vmem:[#allocation5 + $0x30] sm:$0xf]
    %v171 = vld [vmem:[#allocation5 + $0x34] sm:$0xf]
    %v172 = vld [vmem:[#allocation5 + $0x38] sm:$0xf]
    %v173 = vld [vmem:[#allocation5 + $0x3c] sm:$0xf]
    %v174 = vld [vmem:[%s4] sm:$0x1]
    %v176 = vlaneseq
    %v177 = vshrl.u32 %v176, 7
    %v178 = vsub.s32 0, %v177
    %v179 = vrot.slane %v174, %v178
    %v197 = vunpack.c.l.b16 %v158
    %v198 = vunpack.c.l.b16 %v159
    %v199 = vunpack.c.l.b16 %v160
    %v200 = vunpack.c.l.b16 %v161
    %v201 = vunpack.c.l.b16 %v162
    %v202 = vunpack.c.l.b16 %v163
    %v203 = vunpack.c.l.b16 %v164
    %v204 = vunpack.c.l.b16 %v165
    %v205 = vunpack.c.l.b16 %v166
    %v206 = vunpack.c.l.b16 %v167
    %v207 = vunpack.c.l.b16 %v168
    %v208 = vunpack.c.l.b16 %v169
    %v209 = vunpack.c.l.b16 %v170
    %v210 = vunpack.c.l.b16 %v171
    %v211 = vunpack.c.l.b16 %v172
    %v212 = vunpack.c.l.b16 %v173
    %v213 = vpack.c.b16 %v198, %v197
    %v214 = vpack.c.b16 %v200, %v199
    %v215 = vpack.c.b16 %v202, %v201
    %v216 = vpack.c.b16 %v204, %v203
    %v217 = vpack.c.b16 %v206, %v205
    %v218 = vpack.c.b16 %v208, %v207
    %v219 = vpack.c.b16 %v210, %v209
    %v220 = vpack.c.b16 %v212, %v211
    %229 = vmatprep.subr.bf16.mxu0 0
    %230 = vmatpush1.bf16.msra.mxu0 %v213
    %231 = vmatprep.subr.bf16.mxu0 0
    %232 = vmatpush1.bf16.msra.mxu0 %v214
    %233 = vmatprep.subr.bf16.mxu0 0
    %234 = vmatpush1.bf16.msra.mxu0 %v215
    %235 = vmatprep.subr.bf16.mxu0 0
    %236 = vmatpush1.bf16.msra.mxu0 %v216
    %237 = vmatprep.subr.bf16.mxu0 0
    %238 = vmatpush1.bf16.msra.mxu0 %v217
    %239 = vmatprep.subr.bf16.mxu0 0
    %240 = vmatpush1.bf16.msra.mxu0 %v218
    %241 = vmatprep.subr.bf16.mxu0 0
    %242 = vmatpush1.bf16.msra.mxu0 %v219
    %243 = vmatprep.subr.bf16.mxu0 0
    %244 = vmatpush1.bf16.msra.mxu0 %v220
    %245 = vmatprep.subr.bf16.mxu0 0
    %246 = vmatpush1.bf16.msra.mxu0 0
    %247 = vmatprep.subr.bf16.mxu0 0
    %248 = vmatpush1.bf16.msra.mxu0 0
    %249 = vmatprep.subr.bf16.mxu0 0
    %250 = vmatpush1.bf16.msra.mxu0 0
    %251 = vmatprep.subr.bf16.mxu0 0
    %252 = vmatpush1.bf16.msra.mxu0 0
    %253 = vmatprep.subr.bf16.mxu0 0
    %254 = vmatpush1.bf16.msra.mxu0 0
    %255 = vmatprep.subr.bf16.mxu0 0
    %256 = vmatpush1.bf16.msra.mxu0 0
    %257 = vmatprep.subr.bf16.mxu0 0
    %258 = vmatpush1.bf16.msra.mxu0 0
    %259 = vmatprep.subr.bf16.mxu0 0
    %260 = vmatpush1.bf16.msra.mxu0 0
    %261 = vmatprep.mubr.bf16.mxu0 0
    %262 = vmatmul.mubr.bf16.gmra.mrb[0].mxu0 %v156
    %v263 = vpop.f32.mrb[0].mxu0
    %v264 = vadd.f32 %v179, %v263
    %v265 = vpop.f32.mrb[0].mxu0
    %v266 = vpop.f32.mrb[0].mxu0
    %v267 = vadd.f32 %v179, %v266
    %v268 = vpop.f32.mrb[0].mxu0
    %269 = vmatprep.mubr.bf16.mxu0 0
    %270 = vmatmul.mubr.bf16.gmra.mrb[0].mxu0 %v157
    %v271 = vpop.f32.mrb[0].mxu0
    %v272 = vadd.f32 %v179, %v271
    %v273 = vpop.f32.mrb[0].mxu0
    %v274 = vpop.f32.mrb[0].mxu0
    %v275 = vadd.f32 %v179, %v274
    %v276 = vpop.f32.mrb[0].mxu0
    %277 = vdwg.mxu0
    %v278 = vmax.f32 %v264, 0.0
    %v279 = vmax.f32 %v267, 0.0
    %v280 = vmax.f32 %v272, 0.0
    %v281 = vmax.f32 %v275, 0.0
    %v282 = vpack.c.bf16 %v279, %v278
    %v283 = vpack.c.bf16 %v281, %v280
    %v284 = vld [vmem:[%s5] sm:$0xf]
    %v285 = vld [vmem:[%s5 + $0x4] sm:$0xf]
    %v286 = vld [vmem:[%s5 + $0x8] sm:$0xf]
    %v287 = vld [vmem:[%s5 + $0xc] sm:$0xf]
    %v288 = vld [vmem:[%s5 + $0x10] sm:$0xf]
    %v289 = vld [vmem:[%s5 + $0x14] sm:$0xf]
    %v290 = vld [vmem:[%s5 + $0x18] sm:$0xf]
    %v291 = vld [vmem:[%s5 + $0x1c] sm:$0xf]
    %v292 = vld [vmem:[%s5 + $0x20] sm:$0xf]
    %v293 = vld [vmem:[%s5 + $0x24] sm:$0xf]
    %v294 = vld [vmem:[%s5 + $0x28] sm:$0xf]
    %v295 = vld [vmem:[%s5 + $0x2c] sm:$0xf]
    %v296 = vld [vmem:[%s5 + $0x30] sm:$0xf]
    %v297 = vld [vmem:[%s5 + $0x34] sm:$0xf]
    %v298 = vld [vmem:[%s5 + $0x38] sm:$0xf]
    %v299 = vld [vmem:[%s5 + $0x3c] sm:$0xf]
    %v300 = vld [vmem:[%s6] sm:$0x1]
    %v302 = vlaneseq
    %v303 = vshrl.u32 %v302, 7
    %v304 = vsub.s32 0, %v303
    %v305 = vrot.slane %v300, %v304
    %v323 = vunpack.c.l.b16 %v284
    %v324 = vunpack.c.l.b16 %v285
    %v325 = vunpack.c.l.b16 %v286
    %v326 = vunpack.c.l.b16 %v287
    %v327 = vunpack.c.l.b16 %v288
    %v328 = vunpack.c.l.b16 %v289
    %v329 = vunpack.c.l.b16 %v290
    %v330 = vunpack.c.l.b16 %v291
    %v331 = vunpack.c.l.b16 %v292
    %v332 = vunpack.c.l.b16 %v293
    %v333 = vunpack.c.l.b16 %v294
    %v334 = vunpack.c.l.b16 %v295
    %v335 = vunpack.c.l.b16 %v296
    %v336 = vunpack.c.l.b16 %v297
    %v337 = vunpack.c.l.b16 %v298
    %v338 = vunpack.c.l.b16 %v299
    %v339 = vpack.c.b16 %v324, %v323
    %v340 = vpack.c.b16 %v326, %v325
    %v341 = vpack.c.b16 %v328, %v327
    %v342 = vpack.c.b16 %v330, %v329
    %v343 = vpack.c.b16 %v332, %v331
    %v344 = vpack.c.b16 %v334, %v333
    %v345 = vpack.c.b16 %v336, %v335
    %v346 = vpack.c.b16 %v338, %v337
    %355 = vmatprep.subr.bf16.mxu0 0
    %356 = vmatpush1.bf16.msra.mxu0 %v339
    %357 = vmatprep.subr.bf16.mxu0 0
    %358 = vmatpush1.bf16.msra.mxu0 %v340
    %359 = vmatprep.subr.bf16.mxu0 0
    %360 = vmatpush1.bf16.msra.mxu0 %v341
    %361 = vmatprep.subr.bf16.mxu0 0
    %362 = vmatpush1.bf16.msra.mxu0 %v342
    %363 = vmatprep.subr.bf16.mxu0 0
    %364 = vmatpush1.bf16.msra.mxu0 %v343
    %365 = vmatprep.subr.bf16.mxu0 0
    %366 = vmatpush1.bf16.msra.mxu0 %v344
    %367 = vmatprep.subr.bf16.mxu0 0
    %368 = vmatpush1.bf16.msra.mxu0 %v345
    %369 = vmatprep.subr.bf16.mxu0 0
    %370 = vmatpush1.bf16.msra.mxu0 %v346
    %371 = vmatprep.subr.bf16.mxu0 0
    %372 = vmatpush1.bf16.msra.mxu0 0
    %373 = vmatprep.subr.bf16.mxu0 0
    %374 = vmatpush1.bf16.msra.mxu0 0
    %375 = vmatprep.subr.bf16.mxu0 0
    %376 = vmatpush1.bf16.msra.mxu0 0
    %377 = vmatprep.subr.bf16.mxu0 0
    %378 = vmatpush1.bf16.msra.mxu0 0
    %379 = vmatprep.subr.bf16.mxu0 0
    %380 = vmatpush1.bf16.msra.mxu0 0
    %381 = vmatprep.subr.bf16.mxu0 0
    %382 = vmatpush1.bf16.msra.mxu0 0
    %383 = vmatprep.subr.bf16.mxu0 0
    %384 = vmatpush1.bf16.msra.mxu0 0
    %385 = vmatprep.subr.bf16.mxu0 0
    %386 = vmatpush1.bf16.msra.mxu0 0
    %387 = vmatprep.mubr.bf16.mxu0 0
    %388 = vmatmul.mubr.bf16.gmra.mrb[0].mxu0 %v282
    %v389 = vpop.f32.mrb[0].mxu0
    %v390 = vadd.f32 %v305, %v389
    %v391 = vpop.f32.mrb[0].mxu0
    %v392 = vpop.f32.mrb[0].mxu0
    %v393 = vadd.f32 %v305, %v392
    %v394 = vpop.f32.mrb[0].mxu0
    %395 = vmatprep.mubr.bf16.mxu0 0
    %396 = vmatmul.mubr.bf16.gmra.mrb[0].mxu0 %v283
    %v397 = vpop.f32.mrb[0].mxu0
    %v398 = vadd.f32 %v305, %v397
    %v399 = vpop.f32.mrb[0].mxu0
    %v400 = vpop.f32.mrb[0].mxu0
    %v401 = vadd.f32 %v305, %v400
    %v402 = vpop.f32.mrb[0].mxu0
    %403 = vdwg.mxu0
    %v404 = vmax.f32 %v390, 0.0
    %v405 = vmax.f32 %v393, 0.0
    %v406 = vmax.f32 %v398, 0.0
    %v407 = vmax.f32 %v401, 0.0
    %v408 = vpack.c.bf16 %v405, %v404
    %v409 = vpack.c.bf16 %v407, %v406
    %v410 = vld [vmem:[#allocation7] sm:$0xf]
    %v411 = vld [vmem:[#allocation7 + $0x4] sm:$0xf]
    %v412 = vld [vmem:[#allocation7 + $0x8] sm:$0xf]
    %v413 = vld [vmem:[#allocation7 + $0xc] sm:$0xf]
    %v414 = vld [vmem:[#allocation7 + $0x10] sm:$0xf]
    %v415 = vld [vmem:[#allocation7 + $0x14] sm:$0xf]
    %v416 = vld [vmem:[#allocation7 + $0x18] sm:$0xf]
    %v417 = vld [vmem:[#allocation7 + $0x1c] sm:$0xf]
    %v418 = vld [vmem:[#allocation7 + $0x20] sm:$0xf]
    %v419 = vld [vmem:[#allocation7 + $0x24] sm:$0xf]
    %v420 = vld [vmem:[#allocation7 + $0x28] sm:$0xf]
    %v421 = vld [vmem:[#allocation7 + $0x2c] sm:$0xf]
    %v422 = vld [vmem:[#allocation7 + $0x30] sm:$0xf]
    %v423 = vld [vmem:[#allocation7 + $0x34] sm:$0xf]
    %v424 = vld [vmem:[#allocation7 + $0x38] sm:$0xf]
    %v425 = vld [vmem:[#allocation7 + $0x3c] sm:$0xf]
    %v426 = vld [vmem:[%s8] sm:$0x1]
    %v428 = vlaneseq
    %v429 = vshrl.u32 %v428, 7
    %v430 = vsub.s32 0, %v429
    %v431 = vrot.slane %v426, %v430
    %v449 = vunpack.c.l.b16 %v410
    %v450 = vunpack.c.l.b16 %v411
    %v451 = vunpack.c.l.b16 %v412
    %v452 = vunpack.c.l.b16 %v413
    %v453 = vunpack.c.l.b16 %v414
    %v454 = vunpack.c.l.b16 %v415
    %v455 = vunpack.c.l.b16 %v416
    %v456 = vunpack.c.l.b16 %v417
    %v457 = vunpack.c.l.b16 %v418
    %v458 = vunpack.c.l.b16 %v419
    %v459 = vunpack.c.l.b16 %v420
    %v460 = vunpack.c.l.b16 %v421
    %v461 = vunpack.c.l.b16 %v422
    %v462 = vunpack.c.l.b16 %v423
    %v463 = vunpack.c.l.b16 %v424
    %v464 = vunpack.c.l.b16 %v425
    %v465 = vpack.c.b16 %v450, %v449
    %v466 = vpack.c.b16 %v452, %v451
    %v467 = vpack.c.b16 %v454, %v453
    %v468 = vpack.c.b16 %v456, %v455
    %v469 = vpack.c.b16 %v458, %v457
    %v470 = vpack.c.b16 %v460, %v459
    %v471 = vpack.c.b16 %v462, %v461
    %v472 = vpack.c.b16 %v464, %v463
    %481 = vmatprep.subr.bf16.mxu0 0
    %482 = vmatpush1.bf16.msra.mxu0 %v465
    %483 = vmatprep.subr.bf16.mxu0 0
    %484 = vmatpush1.bf16.msra.mxu0 %v466
    %485 = vmatprep.subr.bf16.mxu0 0
    %486 = vmatpush1.bf16.msra.mxu0 %v467
    %487 = vmatprep.subr.bf16.mxu0 0
    %488 = vmatpush1.bf16.msra.mxu0 %v468
    %489 = vmatprep.subr.bf16.mxu0 0
    %490 = vmatpush1.bf16.msra.mxu0 %v469
    %491 = vmatprep.subr.bf16.mxu0 0
    %492 = vmatpush1.bf16.msra.mxu0 %v470
    %493 = vmatprep.subr.bf16.mxu0 0
    %494 = vmatpush1.bf16.msra.mxu0 %v471
    %495 = vmatprep.subr.bf16.mxu0 0
    %496 = vmatpush1.bf16.msra.mxu0 %v472
    %497 = vmatprep.subr.bf16.mxu0 0
    %498 = vmatpush1.bf16.msra.mxu0 0
    %499 = vmatprep.subr.bf16.mxu0 0
    %500 = vmatpush1.bf16.msra.mxu0 0
    %501 = vmatprep.subr.bf16.mxu0 0
    %502 = vmatpush1.bf16.msra.mxu0 0
    %503 = vmatprep.subr.bf16.mxu0 0
    %504 = vmatpush1.bf16.msra.mxu0 0
    %505 = vmatprep.subr.bf16.mxu0 0
    %506 = vmatpush1.bf16.msra.mxu0 0
    %507 = vmatprep.subr.bf16.mxu0 0
    %508 = vmatpush1.bf16.msra.mxu0 0
    %509 = vmatprep.subr.bf16.mxu0 0
    %510 = vmatpush1.bf16.msra.mxu0 0
    %511 = vmatprep.subr.bf16.mxu0 0
    %512 = vmatpush1.bf16.msra.mxu0 0
    %513 = vmatprep.mubr.bf16.mxu0 0
    %514 = vmatmul.mubr.bf16.gmra.mrb[0].mxu0 %v408
    %v515 = vpop.f32.mrb[0].mxu0
    %v516 = vadd.f32 %v431, %v515
    %v517 = vpop.f32.mrb[0].mxu0
    %v518 = vpop.f32.mrb[0].mxu0
    %v519 = vadd.f32 %v431, %v518
    %v520 = vpop.f32.mrb[0].mxu0
    %521 = vmatprep.mubr.bf16.mxu0 0
    %522 = vmatmul.mubr.bf16.gmra.mrb[0].mxu0 %v409
    %v523 = vpop.f32.mrb[0].mxu0
    %v524 = vadd.f32 %v431, %v523
    %v525 = vpop.f32.mrb[0].mxu0
    %v526 = vpop.f32.mrb[0].mxu0
    %v527 = vadd.f32 %v431, %v526
    %v528 = vpop.f32.mrb[0].mxu0
    %529 = vdwg.mxu0
    %530 = vst [vmem:[#allocation8] sm:$0xff] %v516
    %531 = vst [vmem:[#allocation8 + $0x8] sm:$0xff] %v519
    %532 = vst [vmem:[#allocation8 + $0x10] sm:$0xff] %v524
    %533 = vst [vmem:[#allocation8 + $0x18] sm:$0xff] %v527
    // Predicated region
    $region50: #{decoder_forward.1} parent=1 // pred_check
      _
    $region51: #{decoder_forward.1} parent=1 // pred_check_branch
      %535 = sbr.rel (0) target = $region53
    $region52: #{decoder_forward.1} parent=1 // pred_region
      %s537 = ssub.s32 512, 512
      %538 = vsyncadd [#allocation4], %s537
      %s539 = sshll.u32 [#allocation8], 4
      %s540 = int_to_ptr.vmem [resolvable:$true] %s539
      %545 = dma.vmem_to_hbm [thread:$0]  %s540, 512, %s9, [#allocation4], 128, 128, 8
    $region53: #{decoder_forward.1} parent=1 // pred_fallthru
      _
    // Predicated region
    $region54: #{decoder_forward.1} parent=1 // pred_check
      _
    $region55: #{decoder_forward.1} parent=1 // pred_check_branch
      %547 = sbr.rel (0) target = $region57
    $region56: #{decoder_forward.1} parent=1 // pred_region
      %548 = dma.done [#allocation4], 512
    $region57: #{decoder_forward.1} parent=1 // pred_fallthru
      _
    %549 = vsyncpa [#allocation3], 1
    %550 = vsyncpa [#allocation6], 1
    %551 = vsyncpa [#allocation4], 1

</llo_original>
